<compile_context>
chip_gen: v7x
topology: tpu7x:2x2x1
jax: 0.10.0
libtpu: 0.0.40
codegen_flags: <defaults>
</compile_context>

<pallas_src>
import jax
import jax.numpy as jnp
from jax.experimental import pallas as pl
from jax.experimental.pallas import tpu as pltpu


def _sublane_align(dtype) -> int:
    """Native packed sublane height for this dtype: 8 (f32), 16 (bf16), 32 (i8)."""
    itemsize = jnp.dtype(dtype).itemsize
    return max(8, 8 * (4 // max(1, itemsize)))


def _plan_row_stripes(num_rows: int, sub_align: int, max_stripes: int = 4):
    """Split rows into <= max_stripes stripes with sublane-aligned boundaries.

    Returns a tuple of (start_row, num_stripe_rows).  Static (Python-level),
    so every DMA below has a static offset/size.  Falls back to a single
    whole-array stripe when there are not enough aligned row groups.
    """
    groups = num_rows // sub_align
    n = int(max(1, min(max_stripes, groups)))
    if n <= 1:
        return ((0, num_rows),)
    rows_per = (groups // n) * sub_align
    stripes = []
    start = 0
    for i in range(n):
        rows = rows_per if i < n - 1 else num_rows - start
        stripes.append((start, rows))
        start += rows
    return tuple(stripes)


def _make_flatten_dma_kernel(stripes):
    """Kernel: copy the (B, F) input HBM buffer to the output HBM buffer.

    Issues one async DMA per row stripe (all started before any wait) so the
    stripes proceed concurrently on separate DMA engines.
    """

    def kernel(x_ref, o_ref, sems):
        # Start every stripe DMA first ...
        for i, (start, rows) in enumerate(stripes):
            pltpu.make_async_copy(
                x_ref.at[pl.ds(start, rows), :],
                o_ref.at[pl.ds(start, rows), :],
                sems.at[i],
            ).start()
        # ... then wait on all of them.
        for i, (start, rows) in enumerate(stripes):
            pltpu.make_async_copy(
                x_ref.at[pl.ds(start, rows), :],
                o_ref.at[pl.ds(start, rows), :],
                sems.at[i],
            ).wait()

    return kernel


def flatten(x: jax.Array) -> jax.Array:
    """Pallas equivalent of torch `x.view(x.size(0), -1)`.

    NOTE: standalone, `jnp.reshape(x, (b, -1))` is strictly cheaper (zero data
    movement).  This kernel exists to materialize the flattened tensor as an
    explicit HBM->HBM copy at copy roofline.
    """
    b = x.shape[0]
    flat = 1
    for d in x.shape[1:]:
        flat *= d

    # Metadata-only reshape in the wrapper (free for contiguous input).
    x2 = jnp.reshape(x, (b, flat))
    if x2.size == 0:
        return x2

    stripes = _plan_row_stripes(b, _sublane_align(x.dtype))
    kernel = _make_flatten_dma_kernel(stripes)
    nbytes = b * flat * jnp.dtype(x.dtype).itemsize

    return pl.pallas_call(
        kernel,
        out_shape=jax.ShapeDtypeStruct((b, flat), x.dtype),
        # Leave both operands in HBM; the kernel DMAs directly between them.
        in_specs=[pl.BlockSpec(memory_space=pl.ANY)],
        out_specs=pl.BlockSpec(memory_space=pl.ANY),
        scratch_shapes=[pltpu.SemaphoreType.DMA((len(stripes),))],
        cost_estimate=pl.CostEstimate(
            flops=0, transcendentals=0, bytes_accessed=2 * nbytes
        ),
    )(x2)


if __name__ == "__main__":
    key = jax.random.PRNGKey(0)

    # 1) Small NCHW input consistent with a conv-feature-map flatten
    #    (single-stripe DMA path).
    x = jax.random.normal(key, (2, 4, 16, 16), dtype=jnp.float32)
    out = jax.block_until_ready(flatten(x))
    ref = x.reshape(x.shape[0], -1)
    assert out.shape == (2, 4 * 16 * 16), out.shape
    assert out.dtype == x.dtype
    assert jnp.array_equal(out, ref), "Pallas flatten mismatch (f32, 1 stripe)"

    # 2) Larger batch -> multi-stripe (4 concurrent DMAs) path.
    x2 = jax.random.normal(jax.random.PRNGKey(1), (64, 4, 16, 16), dtype=jnp.float32)
    out2 = jax.block_until_ready(flatten(x2))
    assert jnp.array_equal(out2, x2.reshape(64, -1)), "Pallas flatten mismatch (f32, 4 stripes)"

    # 3) bf16 -> 16-row sublane alignment path.
    x3 = jax.random.normal(jax.random.PRNGKey(2), (32, 8, 8, 8), dtype=jnp.bfloat16)
    out3 = jax.block_until_ready(flatten(x3))
    assert out3.dtype == jnp.bfloat16
    assert jnp.array_equal(out3, x3.reshape(32, -1)), "Pallas flatten mismatch (bf16)"

    print("KERNEL_OK")
</pallas_src>

<mosaic_0001>
module attributes {stable_mosaic.version = 11 : i64} {
  func.func @kernel(%arg0: memref<2x1024xf32, #tpu.memory_space<any>>, %arg1: memref<2x1024xf32, #tpu.memory_space<any>>, %arg2: memref<1x!tpu.dma_semaphore, #tpu.memory_space<semaphore_mem>>) attributes {dimension_semantics = [], scalar_prefetch = 0 : i64, scratch_operands = 1 : i64, tpu.core_type = #tpu.core_type<tc>} {
    %c0_i32 = arith.constant 0 : i32
    %c0_i32_0 = arith.constant 0 : i32
    %c0_i32_1 = arith.constant 0 : i32
    %0 = tpu.memref_slice %arg0[%c0_i32_0, %c0_i32_1] : memref<2x1024xf32, #tpu.memory_space<any>> -> memref<2x1024xf32, #tpu.memory_space<any>>
    %c0_i32_2 = arith.constant 0 : i32
    %c0_i32_3 = arith.constant 0 : i32
    %1 = tpu.memref_slice %arg1[%c0_i32_2, %c0_i32_3] : memref<2x1024xf32, #tpu.memory_space<any>> -> memref<2x1024xf32, #tpu.memory_space<any>>
    %2 = tpu.memref_slice %arg2[%c0_i32] : memref<1x!tpu.dma_semaphore, #tpu.memory_space<semaphore_mem>> -> memref<1x!tpu.dma_semaphore, #tpu.memory_space<semaphore_mem>>
    %3 = tpu.memref_squeeze %2 : memref<1x!tpu.dma_semaphore, #tpu.memory_space<semaphore_mem>> -> memref<!tpu.dma_semaphore, #tpu.memory_space<semaphore_mem>>
    tpu.enqueue_dma source(%0 : memref<2x1024xf32, #tpu.memory_space<any>>) target(%1 : memref<2x1024xf32, #tpu.memory_space<any>>) target_semaphore(%3 : memref<!tpu.dma_semaphore, #tpu.memory_space<semaphore_mem>>)
    %c0_i32_4 = arith.constant 0 : i32
    %c0_i32_5 = arith.constant 0 : i32
    %c0_i32_6 = arith.constant 0 : i32
    %4 = tpu.memref_slice %arg0[%c0_i32_5, %c0_i32_6] : memref<2x1024xf32, #tpu.memory_space<any>> -> memref<2x1024xf32, #tpu.memory_space<any>>
    %c0_i32_7 = arith.constant 0 : i32
    %c0_i32_8 = arith.constant 0 : i32
    %5 = tpu.memref_slice %arg1[%c0_i32_7, %c0_i32_8] : memref<2x1024xf32, #tpu.memory_space<any>> -> memref<2x1024xf32, #tpu.memory_space<any>>
    %6 = tpu.memref_slice %arg2[%c0_i32_4] : memref<1x!tpu.dma_semaphore, #tpu.memory_space<semaphore_mem>> -> memref<1x!tpu.dma_semaphore, #tpu.memory_space<semaphore_mem>>
    %7 = tpu.memref_squeeze %6 : memref<1x!tpu.dma_semaphore, #tpu.memory_space<semaphore_mem>> -> memref<!tpu.dma_semaphore, #tpu.memory_space<semaphore_mem>>
    tpu.wait_dma2 semaphore(%7 : memref<!tpu.dma_semaphore, #tpu.memory_space<semaphore_mem>>) src(%4 : memref<2x1024xf32, #tpu.memory_space<any>>) dst(%5 : memref<2x1024xf32, #tpu.memory_space<any>>)
    return
  }
}

</mosaic_0001>

<llo_original>
// kernel: tpu_custom_call.1
$region0: #{tpu_custom_call.1}
  #allocation0 [shape = 'u32[]', space=smem, size = 0x4, offset = 0x4, fixed_abs, tag = 'smem constant byte address 0x4 - core index']
  #allocation1 [shape = 'u32[144,128]{1,0:T(1,128)}', space=vmem, size = 0x12000, scoped, tag = 'internal scratch']
  #allocation2 [shape = 's32[1]{0}', space=sflag, size = 0x4, scoped, tag = 'scratch operand']
  #allocation3 [shape = 's32[]', space=sflag, size = 0x4, offset = 0, fixed_abs, tag = 'sflag constant byte address 0x0 - dummy sync flag']
  #allocation4 [shape = 'u32[0]{0}', space=smem, size = 0, offset = 0, fixed_abs, tag = 'smem constant byte address 0x0 - null']
  %s0 = inlined_call_operand.hbm [shape: f32[2,1024], index: 0, kind: input, shape index: {}]
  %s1 = inlined_call_operand.hbm [shape: f32[2,1024], index: 1, kind: output, shape index: {}]
  %s2 = sld [smem:[#allocation0]]
  $region2: #{tpu_custom_call.1} parent=0
    _
  %s4 = ssub.s32 1, %s2
  %s5 = scalar_select 0, %s4, %s2
  %s7 = sshll.u32 1, 14
  %s8 = sxor.u32 4294967295, %s7
  %s11 = sshll.u32 3, 24
  %s12 = sxor.u32 4294967295, %s11
  %s13 = sand.u32 0, %s12
  %s15 = sor.u32 %s13, 0
  %18 = dma.general %s0, 256, %s1, [#allocation2], [#allocation3], [#allocation4], %s15, 0
  %s19 = smul.u32 2, 1
  %s20 = smul.u32 %s19, 8
  %s21 = sshll.u32 %s20, 4
  %22 = dma.done [#allocation2], %s21
  %23 = vsyncmov [#allocation2]
  %s24 = vpop.sfrf %23
  %p25 = scmp.eq.s32.totalorder %s24, 0
  %p26 = pneg %p25
  %28 = shalt.err (%p26)

</llo_original>
